<compile_context>
chip_gen: v7x
topology: tpu7x:2x2x1
jax: 0.10.0
libtpu: 0.0.40
codegen_flags: <defaults>
</compile_context>

<pallas_src>
import math
from functools import partial

import jax
import jax.numpy as jnp
from jax import lax
from jax.experimental import pallas as pl
from jax.experimental.pallas import tpu as pltpu


def rnn_copy_kernel(x_ref, w_ref, u_ref, vw_ref, vb_ref, y_ref, h_scr,
                    *, seq_len, batch):
    """Whole problem resident in VMEM; T-step recurrence fully unrolled.

    x_ref : (T*B, F)  time-major flattened inputs (row t*B + b == inputs[b, t, :])
    w_ref : (k, F)    RNN input weight  (PyTorch layout, un-transposed)
    u_ref : (k, k)    RNN recurrent weight
    vw_ref: (m, k)    readout weight (nn.Linear)
    vb_ref: (1, m)    readout bias
    y_ref : (T*B, m)  time-major flattened logits (single bulk store)
    h_scr : (T*B, k)  f32 VMEM scratch: pre-projected inputs, overwritten in place
                      by the hidden states as the recurrence consumes them.
    """
    # dot_general contracting lhs dim 1 with rhs dim 1 == lhs @ rhs.T; the transpose
    # is folded into the MXU op, so no transpose ops in the wrapper or the kernel.
    dn_t = (((1,), (1,)), ((), ()))

    u = u_ref[...]                                      # hoisted out of the loop

    # (1) Batched input projection: ONE (T*B, F) @ W^T matmul, off the carry chain.
    h_scr[...] = lax.dot_general(x_ref[...], w_ref[...], dn_t,
                                 preferred_element_type=jnp.float32)   # (T*B, k)

    # (2) Recurrence: fully unrolled static loop.  Each step reads its pre-projected
    #     row block, runs the only chain-dependent ops (small matmul + tanh), and
    #     parks h back into the same rows (they are never re-read as projections).
    k = u.shape[0]
    h = jnp.zeros((batch, k), jnp.float32)              # state_rnn = zeros(B, k)
    for t in range(seq_len):
        rows = pl.ds(t * batch, batch)                  # static offsets
        a_t = h_scr[rows, :]
        h = jnp.tanh(a_t + lax.dot_general(h, u, dn_t,
                                           preferred_element_type=jnp.float32))
        h_scr[rows, :] = h

    # (3) Batched readout (nn.Linear) + single consolidated store of the output.
    y = (lax.dot_general(h_scr[...], vw_ref[...], dn_t,
                         preferred_element_type=jnp.float32)
         + vb_ref[...])                                 # (1, m) broadcasts
    y_ref[...] = y.astype(y_ref.dtype)


@jax.jit
def model_forward(inputs, W, U, Vw, Vb):
    """inputs: (B, T, m+1) float32.  Returns logits (B, T, m)."""
    B, T, F = inputs.shape
    k = W.shape[0]
    m = Vw.shape[0]

    # Time-major flattened 2D activations (one small relayout each way; weights are
    # passed untouched in PyTorch layout).
    x2d = jnp.transpose(inputs, (1, 0, 2)).reshape(T * B, F)
    vb2 = Vb.reshape(1, m)

    vmem = pl.BlockSpec(memory_space=pltpu.MemorySpace.VMEM)
    y2d = pl.pallas_call(
        partial(rnn_copy_kernel, seq_len=T, batch=B),
        out_shape=jax.ShapeDtypeStruct((T * B, m), jnp.float32),
        in_specs=[vmem, vmem, vmem, vmem, vmem],
        out_specs=vmem,
        scratch_shapes=[pltpu.VMEM((T * B, k), jnp.float32)],
    )(x2d, W, U, Vw, vb2)

    return jnp.transpose(y2d.reshape(T, B, m), (1, 0, 2))   # (B, T, m)


def reference_forward(inputs, W, U, Vw, Vb):
    """Pure-JAX reference replicating the PyTorch loop."""
    B, T, F = inputs.shape
    k = W.shape[0]
    h = jnp.zeros((B, k), jnp.float32)
    outs = []
    for t in range(T):
        x = inputs[:, t, :]
        h = jnp.tanh(x @ W.T + h @ U.T)
        outs.append(h @ Vw.T + Vb)
    return jnp.stack(outs, axis=1)


if __name__ == "__main__":
    # Small shapes implied by the module: m symbols, k hidden units,
    # inputs (batch, seq_len, m+1).
    m, k = 8, 32
    B, T = 4, 8

    key = jax.random.PRNGKey(0)
    k_in, k_w, k_u, k_vw, k_vb = jax.random.split(key, 5)

    # RNN(m+1, k): uniform(-1/sqrt(k), 1/sqrt(k))  (matches -2*b*rand + b)
    bound = math.sqrt(1.0 / k)
    W = jax.random.uniform(k_w, (k, m + 1), jnp.float32, -bound, bound)
    U = jax.random.uniform(k_u, (k, k), jnp.float32, -bound, bound)

    # nn.Linear(k, m): uniform(-1/sqrt(k), 1/sqrt(k)) for weight and bias
    lbound = math.sqrt(1.0 / k)
    Vw = jax.random.uniform(k_vw, (m, k), jnp.float32, -lbound, lbound)
    Vb = jax.random.uniform(k_vb, (m,), jnp.float32, -lbound, lbound)

    inputs = jax.random.normal(k_in, (B, T, m + 1), jnp.float32)

    out = model_forward(inputs, W, U, Vw, Vb)
    out = jax.block_until_ready(out)

    ref = reference_forward(inputs, W, U, Vw, Vb)
    assert out.shape == (B, T, m), out.shape
    assert jnp.allclose(out, ref, atol=1e-5, rtol=1e-5), "mismatch vs reference"

    print("KERNEL_OK")
</pallas_src>

<mosaic_0001>
module attributes {stable_mosaic.version = 11 : i64} {
  func.func @rnn_copy_kernel(%arg0: memref<32x9xf32, #tpu.memory_space<vmem>>, %arg1: memref<32x9xf32, #tpu.memory_space<vmem>>, %arg2: memref<32x32xf32, #tpu.memory_space<vmem>>, %arg3: memref<8x32xf32, #tpu.memory_space<vmem>>, %arg4: memref<1x8xf32, #tpu.memory_space<vmem>>, %arg5: memref<32x8xf32, #tpu.memory_space<vmem>>, %arg6: memref<32x32xf32, #tpu.memory_space<vmem>>) attributes {dimension_semantics = [], scalar_prefetch = 0 : i64, scratch_operands = 1 : i64, tpu.core_type = #tpu.core_type<tc>} {
    %c0 = arith.constant 0 : index
    %c0_0 = arith.constant 0 : index
    %0 = vector.load %arg2[%c0, %c0_0] : memref<32x32xf32, #tpu.memory_space<vmem>>, vector<32x32xf32>
    %c0_1 = arith.constant 0 : index
    %c0_2 = arith.constant 0 : index
    %1 = vector.load %arg0[%c0_1, %c0_2] : memref<32x9xf32, #tpu.memory_space<vmem>>, vector<32x9xf32>
    %c0_3 = arith.constant 0 : index
    %c0_4 = arith.constant 0 : index
    %2 = vector.load %arg1[%c0_3, %c0_4] : memref<32x9xf32, #tpu.memory_space<vmem>>, vector<32x9xf32>
    %cst = arith.constant dense<0.000000e+00> : vector<32x32xf32>
    %3 = tpu.matmul %1, %2, %cst {dimension_numbers = #tpu.dot_dimension_numbers<[1], [1], [0], [0], [0, 0, 1, 0], [], []>} : vector<32x9xf32>, vector<32x9xf32>, vector<32x32xf32> -> vector<32x32xf32>
    %c0_5 = arith.constant 0 : index
    %c0_6 = arith.constant 0 : index
    %4 = vector.load %arg6[%c0_5, %c0_6] : memref<32x32xf32, #tpu.memory_space<vmem>>, vector<32x32xf32>
    tpu.vector_store %arg6[%c0_5, %c0_6], %3 {strides = array<i32>} : memref<32x32xf32, #tpu.memory_space<vmem>>, vector<32x32xf32>,
    %cst_7 = arith.constant 0.000000e+00 : f32
    %5 = vector.broadcast %cst_7 : f32 to vector<4x32xf32>
    %c0_8 = arith.constant 0 : index
    %c0_9 = arith.constant 0 : index
    %6 = vector.load %arg6[%c0_8, %c0_9] : memref<32x32xf32, #tpu.memory_space<vmem>>, vector<4x32xf32>
    %cst_10 = arith.constant dense<0.000000e+00> : vector<4x32xf32>
    %7 = tpu.matmul %5, %0, %cst_10 {dimension_numbers = #tpu.dot_dimension_numbers<[1], [1], [0], [0], [0, 0, 1, 0], [], []>} : vector<4x32xf32>, vector<32x32xf32>, vector<4x32xf32> -> vector<4x32xf32>
    %8 = arith.addf %6, %7 : vector<4x32xf32>
    %9 = math.tanh %8 : vector<4x32xf32>
    %c0_11 = arith.constant 0 : index
    %c0_12 = arith.constant 0 : index
    %10 = vector.load %arg6[%c0_11, %c0_12] : memref<32x32xf32, #tpu.memory_space<vmem>>, vector<4x32xf32>
    tpu.vector_store %arg6[%c0_11, %c0_12], %9 {strides = array<i32>} : memref<32x32xf32, #tpu.memory_space<vmem>>, vector<4x32xf32>,
    %c4 = arith.constant 4 : index
    %c0_13 = arith.constant 0 : index
    %11 = vector.load %arg6[%c4, %c0_13] : memref<32x32xf32, #tpu.memory_space<vmem>>, vector<4x32xf32>
    %cst_14 = arith.constant dense<0.000000e+00> : vector<4x32xf32>
    %12 = tpu.matmul %9, %0, %cst_14 {dimension_numbers = #tpu.dot_dimension_numbers<[1], [1], [0], [0], [0, 0, 1, 0], [], []>} : vector<4x32xf32>, vector<32x32xf32>, vector<4x32xf32> -> vector<4x32xf32>
    %13 = arith.addf %11, %12 : vector<4x32xf32>
    %14 = math.tanh %13 : vector<4x32xf32>
    %c4_15 = arith.constant 4 : index
    %c0_16 = arith.constant 0 : index
    %15 = vector.load %arg6[%c4_15, %c0_16] : memref<32x32xf32, #tpu.memory_space<vmem>>, vector<4x32xf32>
    tpu.vector_store %arg6[%c4_15, %c0_16], %14 {strides = array<i32>} : memref<32x32xf32, #tpu.memory_space<vmem>>, vector<4x32xf32>,
    %c8 = arith.constant 8 : index
    %c0_17 = arith.constant 0 : index
    %16 = vector.load %arg6[%c8, %c0_17] : memref<32x32xf32, #tpu.memory_space<vmem>>, vector<4x32xf32>
    %cst_18 = arith.constant dense<0.000000e+00> : vector<4x32xf32>
    %17 = tpu.matmul %14, %0, %cst_18 {dimension_numbers = #tpu.dot_dimension_numbers<[1], [1], [0], [0], [0, 0, 1, 0], [], []>} : vector<4x32xf32>, vector<32x32xf32>, vector<4x32xf32> -> vector<4x32xf32>
    %18 = arith.addf %16, %17 : vector<4x32xf32>
    %19 = math.tanh %18 : vector<4x32xf32>
    %c8_19 = arith.constant 8 : index
    %c0_20 = arith.constant 0 : index
    %20 = vector.load %arg6[%c8_19, %c0_20] : memref<32x32xf32, #tpu.memory_space<vmem>>, vector<4x32xf32>
    tpu.vector_store %arg6[%c8_19, %c0_20], %19 {strides = array<i32>} : memref<32x32xf32, #tpu.memory_space<vmem>>, vector<4x32xf32>,
    %c12 = arith.constant 12 : index
    %c0_21 = arith.constant 0 : index
    %21 = vector.load %arg6[%c12, %c0_21] : memref<32x32xf32, #tpu.memory_space<vmem>>, vector<4x32xf32>
    %cst_22 = arith.constant dense<0.000000e+00> : vector<4x32xf32>
    %22 = tpu.matmul %19, %0, %cst_22 {dimension_numbers = #tpu.dot_dimension_numbers<[1], [1], [0], [0], [0, 0, 1, 0], [], []>} : vector<4x32xf32>, vector<32x32xf32>, vector<4x32xf32> -> vector<4x32xf32>
    %23 = arith.addf %21, %22 : vector<4x32xf32>
    %24 = math.tanh %23 : vector<4x32xf32>
    %c12_23 = arith.constant 12 : index
    %c0_24 = arith.constant 0 : index
    %25 = vector.load %arg6[%c12_23, %c0_24] : memref<32x32xf32, #tpu.memory_space<vmem>>, vector<4x32xf32>
    tpu.vector_store %arg6[%c12_23, %c0_24], %24 {strides = array<i32>} : memref<32x32xf32, #tpu.memory_space<vmem>>, vector<4x32xf32>,
    %c16 = arith.constant 16 : index
    %c0_25 = arith.constant 0 : index
    %26 = vector.load %arg6[%c16, %c0_25] : memref<32x32xf32, #tpu.memory_space<vmem>>, vector<4x32xf32>
    %cst_26 = arith.constant dense<0.000000e+00> : vector<4x32xf32>
    %27 = tpu.matmul %24, %0, %cst_26 {dimension_numbers = #tpu.dot_dimension_numbers<[1], [1], [0], [0], [0, 0, 1, 0], [], []>} : vector<4x32xf32>, vector<32x32xf32>, vector<4x32xf32> -> vector<4x32xf32>
    %28 = arith.addf %26, %27 : vector<4x32xf32>
    %29 = math.tanh %28 : vector<4x32xf32>
    %c16_27 = arith.constant 16 : index
    %c0_28 = arith.constant 0 : index
    %30 = vector.load %arg6[%c16_27, %c0_28] : memref<32x32xf32, #tpu.memory_space<vmem>>, vector<4x32xf32>
    tpu.vector_store %arg6[%c16_27, %c0_28], %29 {strides = array<i32>} : memref<32x32xf32, #tpu.memory_space<vmem>>, vector<4x32xf32>,
    %c20 = arith.constant 20 : index
    %c0_29 = arith.constant 0 : index
    %31 = vector.load %arg6[%c20, %c0_29] : memref<32x32xf32, #tpu.memory_space<vmem>>, vector<4x32xf32>
    %cst_30 = arith.constant dense<0.000000e+00> : vector<4x32xf32>
    %32 = tpu.matmul %29, %0, %cst_30 {dimension_numbers = #tpu.dot_dimension_numbers<[1], [1], [0], [0], [0, 0, 1, 0], [], []>} : vector<4x32xf32>, vector<32x32xf32>, vector<4x32xf32> -> vector<4x32xf32>
    %33 = arith.addf %31, %32 : vector<4x32xf32>
    %34 = math.tanh %33 : vector<4x32xf32>
    %c20_31 = arith.constant 20 : index
    %c0_32 = arith.constant 0 : index
    %35 = vector.load %arg6[%c20_31, %c0_32] : memref<32x32xf32, #tpu.memory_space<vmem>>, vector<4x32xf32>
    tpu.vector_store %arg6[%c20_31, %c0_32], %34 {strides = array<i32>} : memref<32x32xf32, #tpu.memory_space<vmem>>, vector<4x32xf32>,
    %c24 = arith.constant 24 : index
    %c0_33 = arith.constant 0 : index
    %36 = vector.load %arg6[%c24, %c0_33] : memref<32x32xf32, #tpu.memory_space<vmem>>, vector<4x32xf32>
    %cst_34 = arith.constant dense<0.000000e+00> : vector<4x32xf32>
    %37 = tpu.matmul %34, %0, %cst_34 {dimension_numbers = #tpu.dot_dimension_numbers<[1], [1], [0], [0], [0, 0, 1, 0], [], []>} : vector<4x32xf32>, vector<32x32xf32>, vector<4x32xf32> -> vector<4x32xf32>
    %38 = arith.addf %36, %37 : vector<4x32xf32>
    %39 = math.tanh %38 : vector<4x32xf32>
    %c24_35 = arith.constant 24 : index
    %c0_36 = arith.constant 0 : index
    %40 = vector.load %arg6[%c24_35, %c0_36] : memref<32x32xf32, #tpu.memory_space<vmem>>, vector<4x32xf32>
    tpu.vector_store %arg6[%c24_35, %c0_36], %39 {strides = array<i32>} : memref<32x32xf32, #tpu.memory_space<vmem>>, vector<4x32xf32>,
    %c28 = arith.constant 28 : index
    %c0_37 = arith.constant 0 : index
    %41 = vector.load %arg6[%c28, %c0_37] : memref<32x32xf32, #tpu.memory_space<vmem>>, vector<4x32xf32>
    %cst_38 = arith.constant dense<0.000000e+00> : vector<4x32xf32>
    %42 = tpu.matmul %39, %0, %cst_38 {dimension_numbers = #tpu.dot_dimension_numbers<[1], [1], [0], [0], [0, 0, 1, 0], [], []>} : vector<4x32xf32>, vector<32x32xf32>, vector<4x32xf32> -> vector<4x32xf32>
    %43 = arith.addf %41, %42 : vector<4x32xf32>
    %44 = math.tanh %43 : vector<4x32xf32>
    %c28_39 = arith.constant 28 : index
    %c0_40 = arith.constant 0 : index
    %45 = vector.load %arg6[%c28_39, %c0_40] : memref<32x32xf32, #tpu.memory_space<vmem>>, vector<4x32xf32>
    tpu.vector_store %arg6[%c28_39, %c0_40], %44 {strides = array<i32>} : memref<32x32xf32, #tpu.memory_space<vmem>>, vector<4x32xf32>,
    %c0_41 = arith.constant 0 : index
    %c0_42 = arith.constant 0 : index
    %46 = vector.load %arg6[%c0_41, %c0_42] : memref<32x32xf32, #tpu.memory_space<vmem>>, vector<32x32xf32>
    %c0_43 = arith.constant 0 : index
    %c0_44 = arith.constant 0 : index
    %47 = vector.load %arg3[%c0_43, %c0_44] : memref<8x32xf32, #tpu.memory_space<vmem>>, vector<8x32xf32>
    %cst_45 = arith.constant dense<0.000000e+00> : vector<32x8xf32>
    %48 = tpu.matmul %46, %47, %cst_45 {dimension_numbers = #tpu.dot_dimension_numbers<[1], [1], [0], [0], [0, 0, 1, 0], [], []>} : vector<32x32xf32>, vector<8x32xf32>, vector<32x8xf32> -> vector<32x8xf32>
    %c0_46 = arith.constant 0 : index
    %c0_47 = arith.constant 0 : index
    %49 = vector.load %arg4[%c0_46, %c0_47] : memref<1x8xf32, #tpu.memory_space<vmem>>, vector<1x8xf32>
    %50 = vector.broadcast %49 : vector<1x8xf32> to vector<32x8xf32>
    %51 = arith.addf %48, %50 : vector<32x8xf32>
    %c0_48 = arith.constant 0 : index
    %c0_49 = arith.constant 0 : index
    %52 = vector.load %arg5[%c0_48, %c0_49] : memref<32x8xf32, #tpu.memory_space<vmem>>, vector<32x8xf32>
    tpu.vector_store %arg5[%c0_48, %c0_49], %51 {strides = array<i32>} : memref<32x8xf32, #tpu.memory_space<vmem>>, vector<32x8xf32>,
    return
  }
}

</mosaic_0001>

<llo_original>
// kernel: model_forward.1
$region0: #{model_forward.1}
  #allocation0 [shape = 'u32[]', space=smem, size = 0x4, offset = 0x4, fixed_abs, tag = 'smem constant byte address 0x4 - core index']
  #allocation1 [shape = 'u32[144,128]{1,0:T(1,128)}', space=vmem, size = 0x12000, scoped, tag = 'internal scratch']
  #allocation2 [shape = 'f32[32,32]{1,0:T(8,128)}', space=vmem, size = 0x4000, scoped, tag = 'scratch operand']
  %s0 = inlined_call_operand.vmem [shape: f32[32,9], index: 0, kind: input, shape index: {}]
  %s1 = inlined_call_operand.vmem [shape: f32[32,9], index: 1, kind: input, shape index: {}]
  %s2 = inlined_call_operand.vmem [shape: f32[32,32], index: 2, kind: input, shape index: {}]
  %s3 = inlined_call_operand.vmem [shape: f32[8,32], index: 3, kind: input, shape index: {}]
  %s4 = inlined_call_operand.vmem [shape: f32[1,8], index: 4, kind: input, shape index: {}]
  %s5 = inlined_call_operand.vmem [shape: f32[32,8], index: 5, kind: output, shape index: {}]
  %s6 = sld [smem:[#allocation0]]
  $region30: #{model_forward.1} parent=0
    _
  %s8 = ssub.s32 1, %s6
  %s9 = scalar_select 0, %s8, %s6
  // Predicated region
  $region2: #{model_forward.1} parent=0 // pred_check
    _
  $region3: #{model_forward.1} parent=0 // pred_check_branch
    %11 = sbr.rel (0) target = $region5
  $region4: #{model_forward.1} parent=0 // pred_region
    _
  $region5: #{model_forward.1} parent=0 // pred_fallthru
    _
  // Predicated region
  $region6: #{model_forward.1} parent=0 // pred_check
    _
  $region7: #{model_forward.1} parent=0 // pred_check_branch
    %13 = sbr.rel (0) target = $region9
  $region8: #{model_forward.1} parent=0 // pred_region
    _
  $region9: #{model_forward.1} parent=0 // pred_fallthru
    _
  // Predicated region
  $region10: #{model_forward.1} parent=0 // pred_check
    _
  $region11: #{model_forward.1} parent=0 // pred_check_branch
    %15 = sbr.rel (0) target = $region13
  $region12: #{model_forward.1} parent=0 // pred_region
    _
  $region13: #{model_forward.1} parent=0 // pred_fallthru
    _
  // Predicated region
  $region14: #{model_forward.1} parent=0 // pred_check
    _
  $region15: #{model_forward.1} parent=0 // pred_check_branch
    %17 = sbr.rel (0) target = $region17
  $region16: #{model_forward.1} parent=0 // pred_region
    _
  $region17: #{model_forward.1} parent=0 // pred_fallthru
    _
  // Predicated region
  $region18: #{model_forward.1} parent=0 // pred_check
    _
  $region19: #{model_forward.1} parent=0 // pred_check_branch
    %19 = sbr.rel (0) target = $region21
  $region20: #{model_forward.1} parent=0 // pred_region
    _
  $region21: #{model_forward.1} parent=0 // pred_fallthru
    _
  %v20 = vld [vmem:[%s2] sm:$0xff]
  %v21 = vld [vmem:[%s2 + $0x8] sm:$0xff]
  %v22 = vld [vmem:[%s2 + $0x10] sm:$0xff]
  %v23 = vld [vmem:[%s2 + $0x18] sm:$0xff]
  %v24 = vld [vmem:[%s0] sm:$0xff]
  %v25 = vld [vmem:[%s0 + $0x8] sm:$0xff]
  %v26 = vld [vmem:[%s0 + $0x10] sm:$0xff]
  %v27 = vld [vmem:[%s0 + $0x18] sm:$0xff]
  %v28 = vld [vmem:[%s1] sm:$0xff]
  %v29 = vld [vmem:[%s1 + $0x8] sm:$0xff]
  %v30 = vld [vmem:[%s1 + $0x10] sm:$0xff]
  %v31 = vld [vmem:[%s1 + $0x18] sm:$0xff]
  %vm32 = vcmask 72704
  %v34 = vsel %vm32, %v24, 0
  %v37 = vsel %vm32, %v25, 0
  %v40 = vsel %vm32, %v26, 0
  %v43 = vsel %vm32, %v27, 0
  %v46 = vsel %vm32, %v28, 0
  %v49 = vsel %vm32, %v29, 0
  %v52 = vsel %vm32, %v30, 0
  %v55 = vsel %vm32, %v31, 0
  %57 = vmatprep.subr.mxu0 0.0
  %58 = vmatpush1.xpose.msra.mxu0 %v46
  %59 = vmatprep.subr.mxu0 0.0
  %60 = vmatpush1.xpose.msra.mxu0 %v49
  %61 = vmatprep.subr.mxu0 0.0
  %62 = vmatpush1.xpose.msra.mxu0 %v52
  %63 = vmatprep.subr.mxu0 0.0
  %64 = vmatpush1.xpose.msra.mxu0 %v55
  %65 = vmatprep.subr.mxu0 0.0
  %66 = vmatpush1.xpose.msra.mxu0 0.0
  %67 = vmatprep.subr.mxu0 0.0
  %68 = vmatpush1.xpose.msra.mxu0 0.0
  %69 = vmatprep.subr.mxu0 0.0
  %70 = vmatpush1.xpose.msra.mxu0 0.0
  %71 = vmatprep.subr.mxu0 0.0
  %72 = vmatpush1.xpose.msra.mxu0 0.0
  %73 = vmatprep.subr.mxu0 0.0
  %74 = vmatpush1.xpose.msra.mxu0 0.0
  %75 = vmatprep.subr.mxu0 0.0
  %76 = vmatpush1.xpose.msra.mxu0 0.0
  %77 = vmatprep.subr.mxu0 0.0
  %78 = vmatpush1.xpose.msra.mxu0 0.0
  %79 = vmatprep.subr.mxu0 0.0
  %80 = vmatpush1.xpose.msra.mxu0 0.0
  %81 = vmatprep.subr.mxu0 0.0
  %82 = vmatpush1.xpose.msra.mxu0 0.0
  %83 = vmatprep.subr.mxu0 0.0
  %84 = vmatpush1.xpose.msra.mxu0 0.0
  %85 = vmatprep.subr.mxu0 0.0
  %86 = vmatpush1.xpose.msra.mxu0 0.0
  %87 = vmatprep.subr.mxu0 0.0
  %88 = vmatpush1.xpose.msra.mxu0 0.0
  %89 = vmatprep.subr.mxu0 0.0
  %90 = vmatpush1.xpose.msra.mxu0 0.0
  %91 = vmatprep.subr.mxu0 0.0
  %92 = vmatpush1.xpose.msra.mxu0 0.0
  %93 = vmatprep.subr.mxu0 0.0
  %94 = vmatpush1.xpose.msra.mxu0 0.0
  %95 = vmatprep.subr.mxu0 0.0
  %96 = vmatpush1.xpose.msra.mxu0 0.0
  %97 = vmatprep.subr.mxu0 0.0
  %98 = vmatpush1.xpose.msra.mxu0 0.0
  %99 = vmatprep.subr.mxu0 0.0
  %100 = vmatpush1.xpose.msra.mxu0 0.0
  %101 = vmatprep.subr.mxu0 0.0
  %102 = vmatpush1.xpose.msra.mxu0 0.0
  %103 = vmatprep.subr.mxu0 0.0
  %104 = vmatpush1.xpose.msra.mxu0 0.0
  %105 = vmatprep.subr.mxu0 0.0
  %106 = vmatpush1.xpose.msra.mxu0 0.0
  %107 = vmatprep.subr.mxu0 0.0
  %108 = vmatpush1.xpose.msra.mxu0 0.0
  %109 = vmatprep.subr.mxu0 0.0
  %110 = vmatpush1.xpose.msra.mxu0 0.0
  %111 = vmatprep.subr.mxu0 0.0
  %112 = vmatpush1.xpose.msra.mxu0 0.0
  %113 = vmatprep.subr.mxu0 0.0
  %114 = vmatpush1.xpose.msra.mxu0 0.0
  %115 = vmatprep.subr.mxu0 0.0
  %116 = vmatpush1.xpose.msra.mxu0 0.0
  %117 = vmatprep.subr.mxu0 0.0
  %118 = vmatpush1.xpose.msra.mxu0 0.0
  %119 = vmatprep.subr.mxu0 0.0
  %120 = vmatpush1.xpose.msra.mxu0 0.0
  %121 = vmatprep.mubr.f32.mxu0 0.0
  %122 = vmatmul.mubr.f32.gmra.mrb[0].mxu0 %v34
  %v123 = vpop.f32.mrb[0].mxu0
  %v124 = vadd.f32 0.0, %v123
  %v125 = vpop.f32.mrb[0].mxu0
  %126 = vmatprep.mubr.f32.mxu0 0.0
  %127 = vmatmul.mubr.f32.gmra.mrb[0].mxu0 %v37
  %v128 = vpop.f32.mrb[0].mxu0
  %v129 = vadd.f32 0.0, %v128
  %v130 = vpop.f32.mrb[0].mxu0
  %131 = vmatprep.mubr.f32.mxu0 0.0
  %132 = vmatmul.mubr.f32.gmra.mrb[0].mxu0 %v40
  %v133 = vpop.f32.mrb[0].mxu0
  %v134 = vadd.f32 0.0, %v133
  %v135 = vpop.f32.mrb[0].mxu0
  %136 = vmatprep.mubr.f32.mxu0 0.0
  %137 = vmatmul.mubr.f32.gmra.mrb[0].mxu0 %v43
  %v138 = vpop.f32.mrb[0].mxu0
  %v139 = vadd.f32 0.0, %v138
  %v140 = vpop.f32.mrb[0].mxu0
  %141 = vdwg.mxu0
  %vm142 = vcmask 261120
  %143 = vst.msk [vmem:[#allocation2] sm:$0xff] %vm142, %v124
  %144 = vst.msk [vmem:[#allocation2 + $0x8] sm:$0xff] %vm142, %v129
  %145 = vst.msk [vmem:[#allocation2 + $0x10] sm:$0xff] %vm142, %v134
  %146 = vst.msk [vmem:[#allocation2 + $0x18] sm:$0xff] %vm142, %v139
  %v147 = vld [vmem:[#allocation2] sm:$0xf]
  %v149 = vsel %vm142, 0.0, 0
  %v152 = vsel %vm142, %v20, 0
  %v155 = vsel %vm142, %v21, 0
  %v158 = vsel %vm142, %v22, 0
  %v161 = vsel %vm142, %v23, 0
  %163 = vmatprep.subr.mxu0 0.0
  %164 = vmatpush1.xpose.msra.mxu0 %v152
  %165 = vmatprep.subr.mxu0 0.0
  %166 = vmatpush1.xpose.msra.mxu0 %v155
  %167 = vmatprep.subr.mxu0 0.0
  %168 = vmatpush1.xpose.msra.mxu0 %v158
  %169 = vmatprep.subr.mxu0 0.0
  %170 = vmatpush1.xpose.msra.mxu0 %v161
  %171 = vmatprep.subr.mxu0 0.0
  %172 = vmatpush1.xpose.msra.mxu0 0.0
  %173 = vmatprep.subr.mxu0 0.0
  %174 = vmatpush1.xpose.msra.mxu0 0.0
  %175 = vmatprep.subr.mxu0 0.0
  %176 = vmatpush1.xpose.msra.mxu0 0.0
  %177 = vmatprep.subr.mxu0 0.0
  %178 = vmatpush1.xpose.msra.mxu0 0.0
  %179 = vmatprep.subr.mxu0 0.0
  %180 = vmatpush1.xpose.msra.mxu0 0.0
  %181 = vmatprep.subr.mxu0 0.0
  %182 = vmatpush1.xpose.msra.mxu0 0.0
  %183 = vmatprep.subr.mxu0 0.0
  %184 = vmatpush1.xpose.msra.mxu0 0.0
  %185 = vmatprep.subr.mxu0 0.0
  %186 = vmatpush1.xpose.msra.mxu0 0.0
  %187 = vmatprep.subr.mxu0 0.0
  %188 = vmatpush1.xpose.msra.mxu0 0.0
  %189 = vmatprep.subr.mxu0 0.0
  %190 = vmatpush1.xpose.msra.mxu0 0.0
  %191 = vmatprep.subr.mxu0 0.0
  %192 = vmatpush1.xpose.msra.mxu0 0.0
  %193 = vmatprep.subr.mxu0 0.0
  %194 = vmatpush1.xpose.msra.mxu0 0.0
  %195 = vmatprep.subr.mxu0 0.0
  %196 = vmatpush1.xpose.msra.mxu0 0.0
  %197 = vmatprep.subr.mxu0 0.0
  %198 = vmatpush1.xpose.msra.mxu0 0.0
  %199 = vmatprep.subr.mxu0 0.0
  %200 = vmatpush1.xpose.msra.mxu0 0.0
  %201 = vmatprep.subr.mxu0 0.0
  %202 = vmatpush1.xpose.msra.mxu0 0.0
  %203 = vmatprep.subr.mxu0 0.0
  %204 = vmatpush1.xpose.msra.mxu0 0.0
  %205 = vmatprep.subr.mxu0 0.0
  %206 = vmatpush1.xpose.msra.mxu0 0.0
  %207 = vmatprep.subr.mxu0 0.0
  %208 = vmatpush1.xpose.msra.mxu0 0.0
  %209 = vmatprep.subr.mxu0 0.0
  %210 = vmatpush1.xpose.msra.mxu0 0.0
  %211 = vmatprep.subr.mxu0 0.0
  %212 = vmatpush1.xpose.msra.mxu0 0.0
  %213 = vmatprep.subr.mxu0 0.0
  %214 = vmatpush1.xpose.msra.mxu0 0.0
  %215 = vmatprep.subr.mxu0 0.0
  %216 = vmatpush1.xpose.msra.mxu0 0.0
  %217 = vmatprep.subr.mxu0 0.0
  %218 = vmatpush1.xpose.msra.mxu0 0.0
  %219 = vmatprep.subr.mxu0 0.0
  %220 = vmatpush1.xpose.msra.mxu0 0.0
  %221 = vmatprep.subr.mxu0 0.0
  %222 = vmatpush1.xpose.msra.mxu0 0.0
  %223 = vmatprep.subr.mxu0 0.0
  %224 = vmatpush1.xpose.msra.mxu0 0.0
  %225 = vmatprep.subr.mxu0 0.0
  %226 = vmatpush1.xpose.msra.mxu0 0.0
  %227 = vmatprep.mubr.f32.mxu0 0.0
  %228 = vmatmul.mubr.f32.gmra.mrb[0].mxu0 %v149
  %v229 = vpop.f32.mrb[0].mxu0
  %v230 = vadd.f32 0.0, %v229
  %v231 = vpop.f32.mrb[0].mxu0
  %232 = vdwg.mxu0
  %v233 = vadd.f32 %v147, %v230
  %v234 = vtanh.pop %v233
  %vm235 = vcmask 257024
  %236 = vst.msk [vmem:[#allocation2] sm:$0xf] %vm235, %v234
  %v237 = vld [vmem:[#allocation2 + $0x4] sm:$0xf]
  %v239 = vsel %vm142, %v234, 0
  %241 = vmatprep.subr.mxu0 0.0
  %242 = vmatpush1.xpose.msra.mxu0 %v152
  %243 = vmatprep.subr.mxu0 0.0
  %244 = vmatpush1.xpose.msra.mxu0 %v155
  %245 = vmatprep.subr.mxu0 0.0
  %246 = vmatpush1.xpose.msra.mxu0 %v158
  %247 = vmatprep.subr.mxu0 0.0
  %248 = vmatpush1.xpose.msra.mxu0 %v161
  %249 = vmatprep.subr.mxu0 0.0
  %250 = vmatpush1.xpose.msra.mxu0 0.0
  %251 = vmatprep.subr.mxu0 0.0
  %252 = vmatpush1.xpose.msra.mxu0 0.0
  %253 = vmatprep.subr.mxu0 0.0
  %254 = vmatpush1.xpose.msra.mxu0 0.0
  %255 = vmatprep.subr.mxu0 0.0
  %256 = vmatpush1.xpose.msra.mxu0 0.0
  %257 = vmatprep.subr.mxu0 0.0
  %258 = vmatpush1.xpose.msra.mxu0 0.0
  %259 = vmatprep.subr.mxu0 0.0
  %260 = vmatpush1.xpose.msra.mxu0 0.0
  %261 = vmatprep.subr.mxu0 0.0
  %262 = vmatpush1.xpose.msra.mxu0 0.0
  %263 = vmatprep.subr.mxu0 0.0
  %264 = vmatpush1.xpose.msra.mxu0 0.0
  %265 = vmatprep.subr.mxu0 0.0
  %266 = vmatpush1.xpose.msra.mxu0 0.0
  %267 = vmatprep.subr.mxu0 0.0
  %268 = vmatpush1.xpose.msra.mxu0 0.0
  %269 = vmatprep.subr.mxu0 0.0
  %270 = vmatpush1.xpose.msra.mxu0 0.0
  %271 = vmatprep.subr.mxu0 0.0
  %272 = vmatpush1.xpose.msra.mxu0 0.0
  %273 = vmatprep.subr.mxu0 0.0
  %274 = vmatpush1.xpose.msra.mxu0 0.0
  %275 = vmatprep.subr.mxu0 0.0
  %276 = vmatpush1.xpose.msra.mxu0 0.0
  %277 = vmatprep.subr.mxu0 0.0
  %278 = vmatpush1.xpose.msra.mxu0 0.0
  %279 = vmatprep.subr.mxu0 0.0
  %280 = vmatpush1.xpose.msra.mxu0 0.0
  %281 = vmatprep.subr.mxu0 0.0
  %282 = vmatpush1.xpose.msra.mxu0 0.0
  %283 = vmatprep.subr.mxu0 0.0
  %284 = vmatpush1.xpose.msra.mxu0 0.0
  %285 = vmatprep.subr.mxu0 0.0
  %286 = vmatpush1.xpose.msra.mxu0 0.0
  %287 = vmatprep.subr.mxu0 0.0
  %288 = vmatpush1.xpose.msra.mxu0 0.0
  %289 = vmatprep.subr.mxu0 0.0
  %290 = vmatpush1.xpose.msra.mxu0 0.0
  %291 = vmatprep.subr.mxu0 0.0
  %292 = vmatpush1.xpose.msra.mxu0 0.0
  %293 = vmatprep.subr.mxu0 0.0
  %294 = vmatpush1.xpose.msra.mxu0 0.0
  %295 = vmatprep.subr.mxu0 0.0
  %296 = vmatpush1.xpose.msra.mxu0 0.0
  %297 = vmatprep.subr.mxu0 0.0
  %298 = vmatpush1.xpose.msra.mxu0 0.0
  %299 = vmatprep.subr.mxu0 0.0
  %300 = vmatpush1.xpose.msra.mxu0 0.0
  %301 = vmatprep.subr.mxu0 0.0
  %302 = vmatpush1.xpose.msra.mxu0 0.0
  %303 = vmatprep.subr.mxu0 0.0
  %304 = vmatpush1.xpose.msra.mxu0 0.0
  %305 = vmatprep.mubr.f32.mxu0 0.0
  %306 = vmatmul.mubr.f32.gmra.mrb[0].mxu0 %v239
  %v307 = vpop.f32.mrb[0].mxu0
  %v308 = vadd.f32 0.0, %v307
  %v309 = vpop.f32.mrb[0].mxu0
  %310 = vdwg.mxu0
  %v311 = vadd.f32 %v237, %v308
  %v312 = vtanh.pop %v311
  %313 = vst.msk [vmem:[#allocation2 + $0x4] sm:$0xf] %vm235, %v312
  %v314 = vld [vmem:[#allocation2 + $0x8] sm:$0xf]
  %v316 = vsel %vm142, %v312, 0
  %318 = vmatprep.subr.mxu0 0.0
  %319 = vmatpush1.xpose.msra.mxu0 %v152
  %320 = vmatprep.subr.mxu0 0.0
  %321 = vmatpush1.xpose.msra.mxu0 %v155
  %322 = vmatprep.subr.mxu0 0.0
  %323 = vmatpush1.xpose.msra.mxu0 %v158
  %324 = vmatprep.subr.mxu0 0.0
  %325 = vmatpush1.xpose.msra.mxu0 %v161
  %326 = vmatprep.subr.mxu0 0.0
  %327 = vmatpush1.xpose.msra.mxu0 0.0
  %328 = vmatprep.subr.mxu0 0.0
  %329 = vmatpush1.xpose.msra.mxu0 0.0
  %330 = vmatprep.subr.mxu0 0.0
  %331 = vmatpush1.xpose.msra.mxu0 0.0
  %332 = vmatprep.subr.mxu0 0.0
  %333 = vmatpush1.xpose.msra.mxu0 0.0
  %334 = vmatprep.subr.mxu0 0.0
  %335 = vmatpush1.xpose.msra.mxu0 0.0
  %336 = vmatprep.subr.mxu0 0.0
  %337 = vmatpush1.xpose.msra.mxu0 0.0
  %338 = vmatprep.subr.mxu0 0.0
  %339 = vmatpush1.xpose.msra.mxu0 0.0
  %340 = vmatprep.subr.mxu0 0.0
  %341 = vmatpush1.xpose.msra.mxu0 0.0
  %342 = vmatprep.subr.mxu0 0.0
  %343 = vmatpush1.xpose.msra.mxu0 0.0
  %344 = vmatprep.subr.mxu0 0.0
  %345 = vmatpush1.xpose.msra.mxu0 0.0
  %346 = vmatprep.subr.mxu0 0.0
  %347 = vmatpush1.xpose.msra.mxu0 0.0
  %348 = vmatprep.subr.mxu0 0.0
  %349 = vmatpush1.xpose.msra.mxu0 0.0
  %350 = vmatprep.subr.mxu0 0.0
  %351 = vmatpush1.xpose.msra.mxu0 0.0
  %352 = vmatprep.subr.mxu0 0.0
  %353 = vmatpush1.xpose.msra.mxu0 0.0
  %354 = vmatprep.subr.mxu0 0.0
  %355 = vmatpush1.xpose.msra.mxu0 0.0
  %356 = vmatprep.subr.mxu0 0.0
  %357 = vmatpush1.xpose.msra.mxu0 0.0
  %358 = vmatprep.subr.mxu0 0.0
  %359 = vmatpush1.xpose.msra.mxu0 0.0
  %360 = vmatprep.subr.mxu0 0.0
  %361 = vmatpush1.xpose.msra.mxu0 0.0
  %362 = vmatprep.subr.mxu0 0.0
  %363 = vmatpush1.xpose.msra.mxu0 0.0
  %364 = vmatprep.subr.mxu0 0.0
  %365 = vmatpush1.xpose.msra.mxu0 0.0
  %366 = vmatprep.subr.mxu0 0.0
  %367 = vmatpush1.xpose.msra.mxu0 0.0
  %368 = vmatprep.subr.mxu0 0.0
  %369 = vmatpush1.xpose.msra.mxu0 0.0
  %370 = vmatprep.subr.mxu0 0.0
  %371 = vmatpush1.xpose.msra.mxu0 0.0
  %372 = vmatprep.subr.mxu0 0.0
  %373 = vmatpush1.xpose.msra.mxu0 0.0
  %374 = vmatprep.subr.mxu0 0.0
  %375 = vmatpush1.xpose.msra.mxu0 0.0
  %376 = vmatprep.subr.mxu0 0.0
  %377 = vmatpush1.xpose.msra.mxu0 0.0
  %378 = vmatprep.subr.mxu0 0.0
  %379 = vmatpush1.xpose.msra.mxu0 0.0
  %380 = vmatprep.subr.mxu0 0.0
  %381 = vmatpush1.xpose.msra.mxu0 0.0
  %382 = vmatprep.mubr.f32.mxu0 0.0
  %383 = vmatmul.mubr.f32.gmra.mrb[0].mxu0 %v316
  %v384 = vpop.f32.mrb[0].mxu0
  %v385 = vadd.f32 0.0, %v384
  %v386 = vpop.f32.mrb[0].mxu0
  %387 = vdwg.mxu0
  %v388 = vadd.f32 %v314, %v385
  %v389 = vtanh.pop %v388
  %390 = vst.msk [vmem:[#allocation2 + $0x8] sm:$0xf] %vm235, %v389
  %v391 = vld [vmem:[#allocation2 + $0xc] sm:$0xf]
  %v393 = vsel %vm142, %v389, 0
  %395 = vmatprep.subr.mxu0 0.0
  %396 = vmatpush1.xpose.msra.mxu0 %v152
  %397 = vmatprep.subr.mxu0 0.0
  %398 = vmatpush1.xpose.msra.mxu0 %v155
  %399 = vmatprep.subr.mxu0 0.0
  %400 = vmatpush1.xpose.msra.mxu0 %v158
  %401 = vmatprep.subr.mxu0 0.0
  %402 = vmatpush1.xpose.msra.mxu0 %v161
  %403 = vmatprep.subr.mxu0 0.0
  %404 = vmatpush1.xpose.msra.mxu0 0.0
  %405 = vmatprep.subr.mxu0 0.0
  %406 = vmatpush1.xpose.msra.mxu0 0.0
  %407 = vmatprep.subr.mxu0 0.0
  %408 = vmatpush1.xpose.msra.mxu0 0.0
  %409 = vmatprep.subr.mxu0 0.0
  %410 = vmatpush1.xpose.msra.mxu0 0.0
  %411 = vmatprep.subr.mxu0 0.0
  %412 = vmatpush1.xpose.msra.mxu0 0.0
  %413 = vmatprep.subr.mxu0 0.0
  %414 = vmatpush1.xpose.msra.mxu0 0.0
  %415 = vmatprep.subr.mxu0 0.0
  %416 = vmatpush1.xpose.msra.mxu0 0.0
  %417 = vmatprep.subr.mxu0 0.0
  %418 = vmatpush1.xpose.msra.mxu0 0.0
  %419 = vmatprep.subr.mxu0 0.0
  %420 = vmatpush1.xpose.msra.mxu0 0.0
  %421 = vmatprep.subr.mxu0 0.0
  %422 = vmatpush1.xpose.msra.mxu0 0.0
  %423 = vmatprep.subr.mxu0 0.0
  %424 = vmatpush1.xpose.msra.mxu0 0.0
  %425 = vmatprep.subr.mxu0 0.0
  %426 = vmatpush1.xpose.msra.mxu0 0.0
  %427 = vmatprep.subr.mxu0 0.0
  %428 = vmatpush1.xpose.msra.mxu0 0.0
  %429 = vmatprep.subr.mxu0 0.0
  %430 = vmatpush1.xpose.msra.mxu0 0.0
  %431 = vmatprep.subr.mxu0 0.0
  %432 = vmatpush1.xpose.msra.mxu0 0.0
  %433 = vmatprep.subr.mxu0 0.0
  %434 = vmatpush1.xpose.msra.mxu0 0.0
  %435 = vmatprep.subr.mxu0 0.0
  %436 = vmatpush1.xpose.msra.mxu0 0.0
  %437 = vmatprep.subr.mxu0 0.0
  %438 = vmatpush1.xpose.msra.mxu0 0.0
  %439 = vmatprep.subr.mxu0 0.0
  %440 = vmatpush1.xpose.msra.mxu0 0.0
  %441 = vmatprep.subr.mxu0 0.0
  %442 = vmatpush1.xpose.msra.mxu0 0.0
  %443 = vmatprep.subr.mxu0 0.0
  %444 = vmatpush1.xpose.msra.mxu0 0.0
  %445 = vmatprep.subr.mxu0 0.0
  %446 = vmatpush1.xpose.msra.mxu0 0.0
  %447 = vmatprep.subr.mxu0 0.0
  %448 = vmatpush1.xpose.msra.mxu0 0.0
  %449 = vmatprep.subr.mxu0 0.0
  %450 = vmatpush1.xpose.msra.mxu0 0.0
  %451 = vmatprep.subr.mxu0 0.0
  %452 = vmatpush1.xpose.msra.mxu0 0.0
  %453 = vmatprep.subr.mxu0 0.0
  %454 = vmatpush1.xpose.msra.mxu0 0.0
  %455 = vmatprep.subr.mxu0 0.0
  %456 = vmatpush1.xpose.msra.mxu0 0.0
  %457 = vmatprep.subr.mxu0 0.0
  %458 = vmatpush1.xpose.msra.mxu0 0.0
  %459 = vmatprep.mubr.f32.mxu0 0.0
  %460 = vmatmul.mubr.f32.gmra.mrb[0].mxu0 %v393
  %v461 = vpop.f32.mrb[0].mxu0
  %v462 = vadd.f32 0.0, %v461
  %v463 = vpop.f32.mrb[0].mxu0
  %464 = vdwg.mxu0
  %v465 = vadd.f32 %v391, %v462
  %v466 = vtanh.pop %v465
  %467 = vst.msk [vmem:[#allocation2 + $0xc] sm:$0xf] %vm235, %v466
  %v468 = vld [vmem:[#allocation2 + $0x10] sm:$0xf]
  %v470 = vsel %vm142, %v466, 0
  %472 = vmatprep.subr.mxu0 0.0
  %473 = vmatpush1.xpose.msra.mxu0 %v152
  %474 = vmatprep.subr.mxu0 0.0
  %475 = vmatpush1.xpose.msra.mxu0 %v155
  %476 = vmatprep.subr.mxu0 0.0
  %477 = vmatpush1.xpose.msra.mxu0 %v158
  %478 = vmatprep.subr.mxu0 0.0
  %479 = vmatpush1.xpose.msra.mxu0 %v161
  %480 = vmatprep.subr.mxu0 0.0
  %481 = vmatpush1.xpose.msra.mxu0 0.0
  %482 = vmatprep.subr.mxu0 0.0
  %483 = vmatpush1.xpose.msra.mxu0 0.0
  %484 = vmatprep.subr.mxu0 0.0
  %485 = vmatpush1.xpose.msra.mxu0 0.0
  %486 = vmatprep.subr.mxu0 0.0
  %487 = vmatpush1.xpose.msra.mxu0 0.0
  %488 = vmatprep.subr.mxu0 0.0
  %489 = vmatpush1.xpose.msra.mxu0 0.0
  %490 = vmatprep.subr.mxu0 0.0
  %491 = vmatpush1.xpose.msra.mxu0 0.0
  %492 = vmatprep.subr.mxu0 0.0
  %493 = vmatpush1.xpose.msra.mxu0 0.0
  %494 = vmatprep.subr.mxu0 0.0
  %495 = vmatpush1.xpose.msra.mxu0 0.0
  %496 = vmatprep.subr.mxu0 0.0
  %497 = vmatpush1.xpose.msra.mxu0 0.0
  %498 = vmatprep.subr.mxu0 0.0
  %499 = vmatpush1.xpose.msra.mxu0 0.0
  %500 = vmatprep.subr.mxu0 0.0
  %501 = vmatpush1.xpose.msra.mxu0 0.0
  %502 = vmatprep.subr.mxu0 0.0
  %503 = vmatpush1.xpose.msra.mxu0 0.0
  %504 = vmatprep.subr.mxu0 0.0
  %505 = vmatpush1.xpose.msra.mxu0 0.0
  %506 = vmatprep.subr.mxu0 0.0
  %507 = vmatpush1.xpose.msra.mxu0 0.0
  %508 = vmatprep.subr.mxu0 0.0
  %509 = vmatpush1.xpose.msra.mxu0 0.0
  %510 = vmatprep.subr.mxu0 0.0
  %511 = vmatpush1.xpose.msra.mxu0 0.0
  %512 = vmatprep.subr.mxu0 0.0
  %513 = vmatpush1.xpose.msra.mxu0 0.0
  %514 = vmatprep.subr.mxu0 0.0
  %515 = vmatpush1.xpose.msra.mxu0 0.0
  %516 = vmatprep.subr.mxu0 0.0
  %517 = vmatpush1.xpose.msra.mxu0 0.0
  %518 = vmatprep.subr.mxu0 0.0
  %519 = vmatpush1.xpose.msra.mxu0 0.0
  %520 = vmatprep.subr.mxu0 0.0
  %521 = vmatpush1.xpose.msra.mxu0 0.0
  %522 = vmatprep.subr.mxu0 0.0
  %523 = vmatpush1.xpose.msra.mxu0 0.0
  %524 = vmatprep.subr.mxu0 0.0
  %525 = vmatpush1.xpose.msra.mxu0 0.0
  %526 = vmatprep.subr.mxu0 0.0
  %527 = vmatpush1.xpose.msra.mxu0 0.0
  %528 = vmatprep.subr.mxu0 0.0
  %529 = vmatpush1.xpose.msra.mxu0 0.0
  %530 = vmatprep.subr.mxu0 0.0
  %531 = vmatpush1.xpose.msra.mxu0 0.0
  %532 = vmatprep.subr.mxu0 0.0
  %533 = vmatpush1.xpose.msra.mxu0 0.0
  %534 = vmatprep.subr.mxu0 0.0
  %535 = vmatpush1.xpose.msra.mxu0 0.0
  %536 = vmatprep.mubr.f32.mxu0 0.0
  %537 = vmatmul.mubr.f32.gmra.mrb[0].mxu0 %v470
  %v538 = vpop.f32.mrb[0].mxu0
  %v539 = vadd.f32 0.0, %v538
  %v540 = vpop.f32.mrb[0].mxu0
  %541 = vdwg.mxu0
  %v542 = vadd.f32 %v468, %v539
  %v543 = vtanh.pop %v542
  %544 = vst.msk [vmem:[#allocation2 + $0x10] sm:$0xf] %vm235, %v543
  %v545 = vld [vmem:[#allocation2 + $0x14] sm:$0xf]
  %v547 = vsel %vm142, %v543, 0
  %549 = vmatprep.subr.mxu0 0.0
  %550 = vmatpush1.xpose.msra.mxu0 %v152
  %551 = vmatprep.subr.mxu0 0.0
  %552 = vmatpush1.xpose.msra.mxu0 %v155
  %553 = vmatprep.subr.mxu0 0.0
  %554 = vmatpush1.xpose.msra.mxu0 %v158
  %555 = vmatprep.subr.mxu0 0.0
  %556 = vmatpush1.xpose.msra.mxu0 %v161
  %557 = vmatprep.subr.mxu0 0.0
  %558 = vmatpush1.xpose.msra.mxu0 0.0
  %559 = vmatprep.subr.mxu0 0.0
  %560 = vmatpush1.xpose.msra.mxu0 0.0
  %561 = vmatprep.subr.mxu0 0.0
  %562 = vmatpush1.xpose.msra.mxu0 0.0
  %563 = vmatprep.subr.mxu0 0.0
  %564 = vmatpush1.xpose.msra.mxu0 0.0
  %565 = vmatprep.subr.mxu0 0.0
  %566 = vmatpush1.xpose.msra.mxu0 0.0
  %567 = vmatprep.subr.mxu0 0.0
  %568 = vmatpush1.xpose.msra.mxu0 0.0
  %569 = vmatprep.subr.mxu0 0.0
  %570 = vmatpush1.xpose.msra.mxu0 0.0
  %571 = vmatprep.subr.mxu0 0.0
  %572 = vmatpush1.xpose.msra.mxu0 0.0
  %573 = vmatprep.subr.mxu0 0.0
  %574 = vmatpush1.xpose.msra.mxu0 0.0
  %575 = vmatprep.subr.mxu0 0.0
  %576 = vmatpush1.xpose.msra.mxu0 0.0
  %577 = vmatprep.subr.mxu0 0.0
  %578 = vmatpush1.xpose.msra.mxu0 0.0
  %579 = vmatprep.subr.mxu0 0.0
  %580 = vmatpush1.xpose.msra.mxu0 0.0
  %581 = vmatprep.subr.mxu0 0.0
  %582 = vmatpush1.xpose.msra.mxu0 0.0
  %583 = vmatprep.subr.mxu0 0.0
  %584 = vmatpush1.xpose.msra.mxu0 0.0
  %585 = vmatprep.subr.mxu0 0.0
  %586 = vmatpush1.xpose.msra.mxu0 0.0
  %587 = vmatprep.subr.mxu0 0.0
  %588 = vmatpush1.xpose.msra.mxu0 0.0
  %589 = vmatprep.subr.mxu0 0.0
  %590 = vmatpush1.xpose.msra.mxu0 0.0
  %591 = vmatprep.subr.mxu0 0.0
  %592 = vmatpush1.xpose.msra.mxu0 0.0
  %593 = vmatprep.subr.mxu0 0.0
  %594 = vmatpush1.xpose.msra.mxu0 0.0
  %595 = vmatprep.subr.mxu0 0.0
  %596 = vmatpush1.xpose.msra.mxu0 0.0
  %597 = vmatprep.subr.mxu0 0.0
  %598 = vmatpush1.xpose.msra.mxu0 0.0
  %599 = vmatprep.subr.mxu0 0.0
  %600 = vmatpush1.xpose.msra.mxu0 0.0
  %601 = vmatprep.subr.mxu0 0.0
  %602 = vmatpush1.xpose.msra.mxu0 0.0
  %603 = vmatprep.subr.mxu0 0.0
  %604 = vmatpush1.xpose.msra.mxu0 0.0
  %605 = vmatprep.subr.mxu0 0.0
  %606 = vmatpush1.xpose.msra.mxu0 0.0
  %607 = vmatprep.subr.mxu0 0.0
  %608 = vmatpush1.xpose.msra.mxu0 0.0
  %609 = vmatprep.subr.mxu0 0.0
  %610 = vmatpush1.xpose.msra.mxu0 0.0
  %611 = vmatprep.subr.mxu0 0.0
  %612 = vmatpush1.xpose.msra.mxu0 0.0
  %613 = vmatprep.mubr.f32.mxu0 0.0
  %614 = vmatmul.mubr.f32.gmra.mrb[0].mxu0 %v547
  %v615 = vpop.f32.mrb[0].mxu0
  %v616 = vadd.f32 0.0, %v615
  %v617 = vpop.f32.mrb[0].mxu0
  %618 = vdwg.mxu0
  %v619 = vadd.f32 %v545, %v616
  %v620 = vtanh.pop %v619
  %621 = vst.msk [vmem:[#allocation2 + $0x14] sm:$0xf] %vm235, %v620
  %v622 = vld [vmem:[#allocation2 + $0x18] sm:$0xf]
  %v624 = vsel %vm142, %v620, 0
  %626 = vmatprep.subr.mxu0 0.0
  %627 = vmatpush1.xpose.msra.mxu0 %v152
  %628 = vmatprep.subr.mxu0 0.0
  %629 = vmatpush1.xpose.msra.mxu0 %v155
  %630 = vmatprep.subr.mxu0 0.0
  %631 = vmatpush1.xpose.msra.mxu0 %v158
  %632 = vmatprep.subr.mxu0 0.0
  %633 = vmatpush1.xpose.msra.mxu0 %v161
  %634 = vmatprep.subr.mxu0 0.0
  %635 = vmatpush1.xpose.msra.mxu0 0.0
  %636 = vmatprep.subr.mxu0 0.0
  %637 = vmatpush1.xpose.msra.mxu0 0.0
  %638 = vmatprep.subr.mxu0 0.0
  %639 = vmatpush1.xpose.msra.mxu0 0.0
  %640 = vmatprep.subr.mxu0 0.0
  %641 = vmatpush1.xpose.msra.mxu0 0.0
  %642 = vmatprep.subr.mxu0 0.0
  %643 = vmatpush1.xpose.msra.mxu0 0.0
  %644 = vmatprep.subr.mxu0 0.0
  %645 = vmatpush1.xpose.msra.mxu0 0.0
  %646 = vmatprep.subr.mxu0 0.0
  %647 = vmatpush1.xpose.msra.mxu0 0.0
  %648 = vmatprep.subr.mxu0 0.0
  %649 = vmatpush1.xpose.msra.mxu0 0.0
  %650 = vmatprep.subr.mxu0 0.0
  %651 = vmatpush1.xpose.msra.mxu0 0.0
  %652 = vmatprep.subr.mxu0 0.0
  %653 = vmatpush1.xpose.msra.mxu0 0.0
  %654 = vmatprep.subr.mxu0 0.0
  %655 = vmatpush1.xpose.msra.mxu0 0.0
  %656 = vmatprep.subr.mxu0 0.0
  %657 = vmatpush1.xpose.msra.mxu0 0.0
  %658 = vmatprep.subr.mxu0 0.0
  %659 = vmatpush1.xpose.msra.mxu0 0.0
  %660 = vmatprep.subr.mxu0 0.0
  %661 = vmatpush1.xpose.msra.mxu0 0.0
  %662 = vmatprep.subr.mxu0 0.0
  %663 = vmatpush1.xpose.msra.mxu0 0.0
  %664 = vmatprep.subr.mxu0 0.0
  %665 = vmatpush1.xpose.msra.mxu0 0.0
  %666 = vmatprep.subr.mxu0 0.0
  %667 = vmatpush1.xpose.msra.mxu0 0.0
  %668 = vmatprep.subr.mxu0 0.0
  %669 = vmatpush1.xpose.msra.mxu0 0.0
  %670 = vmatprep.subr.mxu0 0.0
  %671 = vmatpush1.xpose.msra.mxu0 0.0
  %672 = vmatprep.subr.mxu0 0.0
  %673 = vmatpush1.xpose.msra.mxu0 0.0
  %674 = vmatprep.subr.mxu0 0.0
  %675 = vmatpush1.xpose.msra.mxu0 0.0
  %676 = vmatprep.subr.mxu0 0.0
  %677 = vmatpush1.xpose.msra.mxu0 0.0
  %678 = vmatprep.subr.mxu0 0.0
  %679 = vmatpush1.xpose.msra.mxu0 0.0
  %680 = vmatprep.subr.mxu0 0.0
  %681 = vmatpush1.xpose.msra.mxu0 0.0
  %682 = vmatprep.subr.mxu0 0.0
  %683 = vmatpush1.xpose.msra.mxu0 0.0
  %684 = vmatprep.subr.mxu0 0.0
  %685 = vmatpush1.xpose.msra.mxu0 0.0
  %686 = vmatprep.subr.mxu0 0.0
  %687 = vmatpush1.xpose.msra.mxu0 0.0
  %688 = vmatprep.subr.mxu0 0.0
  %689 = vmatpush1.xpose.msra.mxu0 0.0
  %690 = vmatprep.mubr.f32.mxu0 0.0
  %691 = vmatmul.mubr.f32.gmra.mrb[0].mxu0 %v624
  %v692 = vpop.f32.mrb[0].mxu0
  %v693 = vadd.f32 0.0, %v692
  %v694 = vpop.f32.mrb[0].mxu0
  %695 = vdwg.mxu0
  %v696 = vadd.f32 %v622, %v693
  %v697 = vtanh.pop %v696
  %698 = vst.msk [vmem:[#allocation2 + $0x18] sm:$0xf] %vm235, %v697
  %v699 = vld [vmem:[#allocation2 + $0x1c] sm:$0xf]
  %v701 = vsel %vm142, %v697, 0
  %703 = vmatprep.subr.mxu0 0.0
  %704 = vmatpush1.xpose.msra.mxu0 %v152
  %705 = vmatprep.subr.mxu0 0.0
  %706 = vmatpush1.xpose.msra.mxu0 %v155
  %707 = vmatprep.subr.mxu0 0.0
  %708 = vmatpush1.xpose.msra.mxu0 %v158
  %709 = vmatprep.subr.mxu0 0.0
  %710 = vmatpush1.xpose.msra.mxu0 %v161
  %711 = vmatprep.subr.mxu0 0.0
  %712 = vmatpush1.xpose.msra.mxu0 0.0
  %713 = vmatprep.subr.mxu0 0.0
  %714 = vmatpush1.xpose.msra.mxu0 0.0
  %715 = vmatprep.subr.mxu0 0.0
  %716 = vmatpush1.xpose.msra.mxu0 0.0
  %717 = vmatprep.subr.mxu0 0.0
  %718 = vmatpush1.xpose.msra.mxu0 0.0
  %719 = vmatprep.subr.mxu0 0.0
  %720 = vmatpush1.xpose.msra.mxu0 0.0
  %721 = vmatprep.subr.mxu0 0.0
  %722 = vmatpush1.xpose.msra.mxu0 0.0
  %723 = vmatprep.subr.mxu0 0.0
  %724 = vmatpush1.xpose.msra.mxu0 0.0
  %725 = vmatprep.subr.mxu0 0.0
  %726 = vmatpush1.xpose.msra.mxu0 0.0
  %727 = vmatprep.subr.mxu0 0.0
  %728 = vmatpush1.xpose.msra.mxu0 0.0
  %729 = vmatprep.subr.mxu0 0.0
  %730 = vmatpush1.xpose.msra.mxu0 0.0
  %731 = vmatprep.subr.mxu0 0.0
  %732 = vmatpush1.xpose.msra.mxu0 0.0
  %733 = vmatprep.subr.mxu0 0.0
  %734 = vmatpush1.xpose.msra.mxu0 0.0
  %735 = vmatprep.subr.mxu0 0.0
  %736 = vmatpush1.xpose.msra.mxu0 0.0
  %737 = vmatprep.subr.mxu0 0.0
  %738 = vmatpush1.xpose.msra.mxu0 0.0
  %739 = vmatprep.subr.mxu0 0.0
  %740 = vmatpush1.xpose.msra.mxu0 0.0
  %741 = vmatprep.subr.mxu0 0.0
  %742 = vmatpush1.xpose.msra.mxu0 0.0
  %743 = vmatprep.subr.mxu0 0.0
  %744 = vmatpush1.xpose.msra.mxu0 0.0
  %745 = vmatprep.subr.mxu0 0.0
  %746 = vmatpush1.xpose.msra.mxu0 0.0
  %747 = vmatprep.subr.mxu0 0.0
  %748 = vmatpush1.xpose.msra.mxu0 0.0
  %749 = vmatprep.subr.mxu0 0.0
  %750 = vmatpush1.xpose.msra.mxu0 0.0
  %751 = vmatprep.subr.mxu0 0.0
  %752 = vmatpush1.xpose.msra.mxu0 0.0
  %753 = vmatprep.subr.mxu0 0.0
  %754 = vmatpush1.xpose.msra.mxu0 0.0
  %755 = vmatprep.subr.mxu0 0.0
  %756 = vmatpush1.xpose.msra.mxu0 0.0
  %757 = vmatprep.subr.mxu0 0.0
  %758 = vmatpush1.xpose.msra.mxu0 0.0
  %759 = vmatprep.subr.mxu0 0.0
  %760 = vmatpush1.xpose.msra.mxu0 0.0
  %761 = vmatprep.subr.mxu0 0.0
  %762 = vmatpush1.xpose.msra.mxu0 0.0
  %763 = vmatprep.subr.mxu0 0.0
  %764 = vmatpush1.xpose.msra.mxu0 0.0
  %765 = vmatprep.subr.mxu0 0.0
  %766 = vmatpush1.xpose.msra.mxu0 0.0
  %767 = vmatprep.mubr.f32.mxu0 0.0
  %768 = vmatmul.mubr.f32.gmra.mrb[0].mxu0 %v701
  %v769 = vpop.f32.mrb[0].mxu0
  %v770 = vadd.f32 0.0, %v769
  %v771 = vpop.f32.mrb[0].mxu0
  %772 = vdwg.mxu0
  %v773 = vadd.f32 %v699, %v770
  %v774 = vtanh.pop %v773
  %775 = vst.msk [vmem:[#allocation2 + $0x1c] sm:$0xf] %vm235, %v774
  %v776 = vld [vmem:[#allocation2] sm:$0xff]
  %v777 = vld [vmem:[#allocation2 + $0x8] sm:$0xff]
  %v778 = vld [vmem:[#allocation2 + $0x10] sm:$0xff]
  %v779 = vld [vmem:[#allocation2 + $0x18] sm:$0xff]
  %v780 = vld [vmem:[%s3] sm:$0xff]
  %v781 = vld [vmem:[%s4] sm:$0x1]
  %v783 = vlaneseq
  %v784 = vshrl.u32 %v783, 7
  %v785 = vsub.s32 0, %v784
  %v786 = vrot.slane %v781, %v785
  %v789 = vsel %vm142, %v776, 0
  %v792 = vsel %vm142, %v777, 0
  %v795 = vsel %vm142, %v778, 0
  %v798 = vsel %vm142, %v779, 0
  %v801 = vsel %vm142, %v780, 0
  %803 = vmatprep.subr.mxu0 0.0
  %804 = vmatpush1.xpose.msra.mxu0 %v801
  %805 = vmatprep.subr.mxu0 0.0
  %806 = vmatpush1.xpose.msra.mxu0 0.0
  %807 = vmatprep.subr.mxu0 0.0
  %808 = vmatpush1.xpose.msra.mxu0 0.0
  %809 = vmatprep.subr.mxu0 0.0
  %810 = vmatpush1.xpose.msra.mxu0 0.0
  %811 = vmatprep.subr.mxu0 0.0
  %812 = vmatpush1.xpose.msra.mxu0 0.0
  %813 = vmatprep.subr.mxu0 0.0
  %814 = vmatpush1.xpose.msra.mxu0 0.0
  %815 = vmatprep.subr.mxu0 0.0
  %816 = vmatpush1.xpose.msra.mxu0 0.0
  %817 = vmatprep.subr.mxu0 0.0
  %818 = vmatpush1.xpose.msra.mxu0 0.0
  %819 = vmatprep.subr.mxu0 0.0
  %820 = vmatpush1.xpose.msra.mxu0 0.0
  %821 = vmatprep.subr.mxu0 0.0
  %822 = vmatpush1.xpose.msra.mxu0 0.0
  %823 = vmatprep.subr.mxu0 0.0
  %824 = vmatpush1.xpose.msra.mxu0 0.0
  %825 = vmatprep.subr.mxu0 0.0
  %826 = vmatpush1.xpose.msra.mxu0 0.0
  %827 = vmatprep.subr.mxu0 0.0
  %828 = vmatpush1.xpose.msra.mxu0 0.0
  %829 = vmatprep.subr.mxu0 0.0
  %830 = vmatpush1.xpose.msra.mxu0 0.0
  %831 = vmatprep.subr.mxu0 0.0
  %832 = vmatpush1.xpose.msra.mxu0 0.0
  %833 = vmatprep.subr.mxu0 0.0
  %834 = vmatpush1.xpose.msra.mxu0 0.0
  %835 = vmatprep.subr.mxu0 0.0
  %836 = vmatpush1.xpose.msra.mxu0 0.0
  %837 = vmatprep.subr.mxu0 0.0
  %838 = vmatpush1.xpose.msra.mxu0 0.0
  %839 = vmatprep.subr.mxu0 0.0
  %840 = vmatpush1.xpose.msra.mxu0 0.0
  %841 = vmatprep.subr.mxu0 0.0
  %842 = vmatpush1.xpose.msra.mxu0 0.0
  %843 = vmatprep.subr.mxu0 0.0
  %844 = vmatpush1.xpose.msra.mxu0 0.0
  %845 = vmatprep.subr.mxu0 0.0
  %846 = vmatpush1.xpose.msra.mxu0 0.0
  %847 = vmatprep.subr.mxu0 0.0
  %848 = vmatpush1.xpose.msra.mxu0 0.0
  %849 = vmatprep.subr.mxu0 0.0
  %850 = vmatpush1.xpose.msra.mxu0 0.0
  %851 = vmatprep.subr.mxu0 0.0
  %852 = vmatpush1.xpose.msra.mxu0 0.0
  %853 = vmatprep.subr.mxu0 0.0
  %854 = vmatpush1.xpose.msra.mxu0 0.0
  %855 = vmatprep.subr.mxu0 0.0
  %856 = vmatpush1.xpose.msra.mxu0 0.0
  %857 = vmatprep.subr.mxu0 0.0
  %858 = vmatpush1.xpose.msra.mxu0 0.0
  %859 = vmatprep.subr.mxu0 0.0
  %860 = vmatpush1.xpose.msra.mxu0 0.0
  %861 = vmatprep.subr.mxu0 0.0
  %862 = vmatpush1.xpose.msra.mxu0 0.0
  %863 = vmatprep.subr.mxu0 0.0
  %864 = vmatpush1.xpose.msra.mxu0 0.0
  %865 = vmatprep.subr.mxu0 0.0
  %866 = vmatpush1.xpose.msra.mxu0 0.0
  %867 = vmatprep.mubr.f32.mxu0 0.0
  %868 = vmatmul.mubr.f32.gmra.mrb[0].mxu0 %v789
  %v869 = vpop.f32.mrb[0].mxu0
  %v870 = vadd.f32 %v786, %v869
  %v871 = vpop.f32.mrb[0].mxu0
  %872 = vmatprep.mubr.f32.mxu0 0.0
  %873 = vmatmul.mubr.f32.gmra.mrb[0].mxu0 %v792
  %v874 = vpop.f32.mrb[0].mxu0
  %v875 = vadd.f32 %v786, %v874
  %v876 = vpop.f32.mrb[0].mxu0
  %877 = vmatprep.mubr.f32.mxu0 0.0
  %878 = vmatmul.mubr.f32.gmra.mrb[0].mxu0 %v795
  %v879 = vpop.f32.mrb[0].mxu0
  %v880 = vadd.f32 %v786, %v879
  %v881 = vpop.f32.mrb[0].mxu0
  %882 = vmatprep.mubr.f32.mxu0 0.0
  %883 = vmatmul.mubr.f32.gmra.mrb[0].mxu0 %v798
  %v884 = vpop.f32.mrb[0].mxu0
  %v885 = vadd.f32 %v786, %v884
  %v886 = vpop.f32.mrb[0].mxu0
  %887 = vdwg.mxu0
  %vm888 = vcmask 64512
  %889 = vst.msk [vmem:[%s5] sm:$0xff] %vm888, %v870
  %890 = vst.msk [vmem:[%s5 + $0x8] sm:$0xff] %vm888, %v875
  %891 = vst.msk [vmem:[%s5 + $0x10] sm:$0xff] %vm888, %v880
  %892 = vst.msk [vmem:[%s5 + $0x18] sm:$0xff] %vm888, %v885
  // Predicated region
  $region22: #{model_forward.1} parent=0 // pred_check
    _
  $region23: #{model_forward.1} parent=0 // pred_check_branch
    %894 = sbr.rel (0) target = $region25
  $region24: #{model_forward.1} parent=0 // pred_region
    _
  $region25: #{model_forward.1} parent=0 // pred_fallthru
    _
  // Predicated region
  $region26: #{model_forward.1} parent=0 // pred_check
    _
  $region27: #{model_forward.1} parent=0 // pred_check_branch
    %896 = sbr.rel (0) target = $region29
  $region28: #{model_forward.1} parent=0 // pred_region
    _
  $region29: #{model_forward.1} parent=0 // pred_fallthru
    _

</llo_original>
